<compile_context>
chip_gen: v6e
topology: v6e:2x2x1
jax: 0.10.0
libtpu: 0.0.40
codegen_flags: <defaults>
</compile_context>

<pallas_src>
import functools
import math

import numpy as np

import jax
import jax.numpy as jnp
from jax.experimental import pallas as pl
from jax.experimental.pallas import tpu as pltpu


def _basic_layer_kernel(x_ref, w_ref, bn_ref, msk_ref, o_ref, patch_ref, *,
                        width_p):
    """Fused BN(affine) + ReLU + 3x3 same-conv for one image.

    x_ref:     (1, Cin, HWp)      input (NCHW, spatial flattened, W padded), bf16
    w_ref:     (Cout, 9*Cin)      im2col conv weights, bf16
    bn_ref:    (2, Cin, 1)        [0] = scale, [1] = shift (folded BN), f32
    msk_ref:   (9, 1, HWp)        per-tap (dh, dw) validity masks, f32
    o_ref:     (1, Cout, HWp)     output (lane-dense), f32
    patch_ref: (9*Cin, HWp)       scratch: im2col matmul operand, bf16
    """
    _, cin, hwp = x_ref.shape

    # Upcast the bf16 input once; BN (folded affine) + ReLU in f32 on the VPU
    # (v5e has no bf16 VALU path; a single upcast pass hides under BN math).
    x = x_ref[0].astype(jnp.float32)                       # (Cin, HWp)
    a = jnp.maximum(x * bn_ref[0] + bn_ref[1], 0.0)        # (Cin, HWp)

    # im2col via XLU rolls of the in-register activations: tap (dh, dw) is the
    # flat activation slab rotated by dh*Wp + dw, zeroed wherever
    # (h+dh, w+dw) falls outside the true HxW image (the mask also covers the
    # circular-wrap lanes, so the rotate is exact "same" padding).  The mask
    # multiply and bf16 cast are fused into the staging store.
    t = 0
    for dh in (-1, 0, 1):
        for dw in (-1, 0, 1):
            shift = dh * width_p + dw
            if shift == 0:
                tap = a                                    # center tap: reuse vregs
            else:
                tap = pltpu.roll(a, shift=(-shift) % hwp, axis=1)
            patch_ref[t * cin:(t + 1) * cin, :] = (
                tap * msk_ref[t]).astype(jnp.bfloat16)
            t += 1

    # Single MXU pass: (Cout, 9*Cin) @ (9*Cin, HWp), bf16 in, f32 accumulate.
    # At these channel counts the MXU is far from being the bottleneck; keep
    # one K = 9*Cin matmul (9 accumulated K=Cin matmuls only pay at large Cin).
    o_ref[0] = jnp.dot(w_ref[...], patch_ref[...],
                       preferred_element_type=jnp.float32)

    # Dropout: eval-mode identity.


@jax.jit
def basic_layer_forward(x_nchw, conv_w_hwio, bn_gamma, bn_beta,
                        bn_running_mean, bn_running_var):
    """Wrapper: NCHW in / NCHW out, matching the PyTorch module (eval mode)."""
    eps = 1e-5
    N, Cin, H, W = x_nchw.shape
    Cout = conv_w_hwio.shape[3]

    # Pad W -> Wp so that H*Wp is a multiple of 128: keeps every in-kernel
    # roll / store lane-dense (unmasked vst) for arbitrary H, W.
    lane_mult = 128 // math.gcd(H, 128)
    Wp = ((W + lane_mult - 1) // lane_mult) * lane_mult
    HWp = H * Wp

    # Fold BN running stats into a per-channel affine, packed as one operand.
    scale = bn_gamma / jnp.sqrt(bn_running_var + eps)            # (Cin,)
    shift = bn_beta - bn_running_mean * scale                    # (Cin,)
    bn_packed = jnp.stack([scale, shift]).reshape(2, Cin, 1).astype(jnp.float32)

    # Conv weights as one (Cout, 9*Cin) im2col matrix, bf16 for the MXU.
    w_mat = jnp.transpose(conv_w_hwio, (3, 0, 1, 2)).reshape(Cout, 9 * Cin)
    w_mat = w_mat.astype(jnp.bfloat16)

    # Combined (dh, dw) validity masks per tap (static, trace time).  A tap is
    # valid iff (h+dh, w+dw) lies inside the true HxW image; this covers the
    # 3x3 "same" zero padding, the width-pad columns and the roll wrap lanes.
    hh = np.arange(H)[:, None]
    ww = np.arange(Wp)[None, :]
    mask_list = []
    for dh in (-1, 0, 1):
        for dw in (-1, 0, 1):
            mask_list.append((hh + dh >= 0) & (hh + dh < H) &
                             (ww + dw >= 0) & (ww + dw < W))
    masks = jnp.asarray(
        np.stack(mask_list).astype(np.float32).reshape(9, 1, HWp))

    # NCHW consumed directly as (N, Cin, H*Wp): pad width (if needed) and a
    # free reshape, no transpose.  bf16 input halves the dominant HBM read.
    if Wp != W:
        x_nchw = jnp.pad(x_nchw, ((0, 0), (0, 0), (0, 0), (0, Wp - W)))
    x_flat = x_nchw.reshape(N, Cin, HWp).astype(jnp.bfloat16)

    out_flat = pl.pallas_call(
        functools.partial(_basic_layer_kernel, width_p=Wp),
        out_shape=jax.ShapeDtypeStruct((N, Cout, HWp), jnp.float32),
        grid_spec=pltpu.PrefetchScalarGridSpec(
            num_scalar_prefetch=0,
            grid=(N,),                      # one image per step; scales with batch
            in_specs=[
                pl.BlockSpec((1, Cin, HWp), lambda n: (n, 0, 0)),
                pl.BlockSpec((Cout, 9 * Cin), lambda n: (0, 0)),
                pl.BlockSpec((2, Cin, 1), lambda n: (0, 0, 0)),
                pl.BlockSpec((9, 1, HWp), lambda n: (0, 0, 0)),
            ],
            out_specs=pl.BlockSpec((1, Cout, HWp), lambda n: (n, 0, 0)),
            scratch_shapes=[
                pltpu.VMEM((9 * Cin, HWp), jnp.bfloat16),   # bf16 im2col staging
            ],
        ),
        compiler_params=pltpu.CompilerParams(
            dimension_semantics=("parallel",)),
    )(x_flat, w_mat, bn_packed, masks)

    out = out_flat.reshape(N, Cout, H, Wp)
    if Wp != W:
        out = out[:, :, :, :W]
    return out


def _reference_forward(x_nchw, w_hwio, gamma, beta, mean, var):
    """Pure-JAX reference (eval-mode BasicLayer) for correctness checking."""
    eps = 1e-5
    inv = gamma / jnp.sqrt(var + eps)
    a = ((x_nchw - mean[None, :, None, None]) * inv[None, :, None, None]
         + beta[None, :, None, None])
    a = jnp.maximum(a, 0.0)
    return jax.lax.conv_general_dilated(
        a, w_hwio, window_strides=(1, 1), padding="SAME",
        dimension_numbers=("NCHW", "HWIO", "NCHW"),
        precision=jax.lax.Precision.HIGHEST)


if __name__ == "__main__":
    # Shapes consistent with BasicLayer(in_channels=4, out_channels=8, p=0.1).
    N, Cin, Cout, H, W = 2, 4, 8, 16, 16

    key = jax.random.PRNGKey(0)
    k_x, k_w, k_g, k_b, k_m, k_v, k_x2 = jax.random.split(key, 7)

    x = jax.random.normal(k_x, (N, Cin, H, W), dtype=jnp.float32)

    fan_in = Cin * 3 * 3
    conv_w_hwio = (jax.random.normal(k_w, (3, 3, Cin, Cout), dtype=jnp.float32)
                   * (2.0 / fan_in) ** 0.5)
    bn_gamma = 1.0 + 0.1 * jax.random.normal(k_g, (Cin,), dtype=jnp.float32)
    bn_beta = 0.1 * jax.random.normal(k_b, (Cin,), dtype=jnp.float32)
    bn_running_mean = 0.1 * jax.random.normal(k_m, (Cin,), dtype=jnp.float32)
    bn_running_var = jnp.abs(
        1.0 + 0.1 * jax.random.normal(k_v, (Cin,), dtype=jnp.float32))

    out = basic_layer_forward(x, conv_w_hwio, bn_gamma, bn_beta,
                              bn_running_mean, bn_running_var)
    out = jax.block_until_ready(out)
    ref = _reference_forward(x, conv_w_hwio, bn_gamma, bn_beta,
                             bn_running_mean, bn_running_var)
    assert out.shape == (N, Cout, H, W)
    # bf16 input + bf16 MXU operands, f32 accumulation -> loose tolerance.
    assert jnp.allclose(out, ref, atol=4e-2, rtol=4e-2), "mismatch vs reference"

    # Also exercise the lane-padding path (H*W not a multiple of 128).
    H2, W2 = 8, 10
    x2 = jax.random.normal(k_x2, (N, Cin, H2, W2), dtype=jnp.float32)
    out2 = jax.block_until_ready(
        basic_layer_forward(x2, conv_w_hwio, bn_gamma, bn_beta,
                            bn_running_mean, bn_running_var))
    ref2 = _reference_forward(x2, conv_w_hwio, bn_gamma, bn_beta,
                              bn_running_mean, bn_running_var)
    assert out2.shape == (N, Cout, H2, W2)
    assert jnp.allclose(out2, ref2, atol=4e-2, rtol=4e-2), "mismatch (padded W)"

    print("KERNEL_OK")
</pallas_src>

<mosaic_0001>
module attributes {stable_mosaic.version = 11 : i64} {
  func.func @_basic_layer_kernel(%arg0: i32, %arg1: memref<1x4x256xbf16, #tpu.memory_space<vmem>>, %arg2: memref<8x36xbf16, #tpu.memory_space<vmem>>, %arg3: memref<2x4x1xf32, #tpu.memory_space<vmem>>, %arg4: memref<9x1x256xf32, #tpu.memory_space<vmem>>, %arg5: memref<1x8x256xf32, #tpu.memory_space<vmem>>, %arg6: memref<36x256xbf16, #tpu.memory_space<vmem>>) attributes {dimension_semantics = [#tpu.dimension_semantics<parallel>], iteration_bounds = array<i64: 2>, scalar_prefetch = 0 : i64, scratch_operands = 1 : i64, tpu.core_type = #tpu.core_type<tc>, window_params = [{transform_indices = @transform_0, window_bounds = array<i64: 1, 4, 256>}, {pipeline_mode = #tpu.pipeline_mode<synchronous>, transform_indices = @transform_1, window_bounds = array<i64: 8, 36>}, {pipeline_mode = #tpu.pipeline_mode<synchronous>, transform_indices = @transform_2, window_bounds = array<i64: 2, 4, 1>}, {pipeline_mode = #tpu.pipeline_mode<synchronous>, transform_indices = @transform_3, window_bounds = array<i64: 9, 1, 256>}, {transform_indices = @transform_4, window_bounds = array<i64: 1, 8, 256>}]} {
    %c0 = arith.constant 0 : index
    %c0_0 = arith.constant 0 : index
    %c0_1 = arith.constant 0 : index
    %0 = vector.load %arg1[%c0, %c0_0, %c0_1] : memref<1x4x256xbf16, #tpu.memory_space<vmem>>, vector<1x4x256xbf16>
    %1 = vector.shape_cast %0 : vector<1x4x256xbf16> to vector<4x256xbf16>
    %2 = arith.extf %1 : vector<4x256xbf16> to vector<4x256xf32>
    %c0_2 = arith.constant 0 : index
    %c0_3 = arith.constant 0 : index
    %c0_4 = arith.constant 0 : index
    %3 = vector.load %arg3[%c0_2, %c0_3, %c0_4] : memref<2x4x1xf32, #tpu.memory_space<vmem>>, vector<1x4x1xf32>
    %4 = vector.shape_cast %3 : vector<1x4x1xf32> to vector<4x1xf32>
    %5 = vector.broadcast %4 : vector<4x1xf32> to vector<4x256xf32>
    %6 = arith.mulf %2, %5 : vector<4x256xf32>
    %c1 = arith.constant 1 : index
    %c0_5 = arith.constant 0 : index
    %c0_6 = arith.constant 0 : index
    %7 = vector.load %arg3[%c1, %c0_5, %c0_6] : memref<2x4x1xf32, #tpu.memory_space<vmem>>, vector<1x4x1xf32>
    %8 = vector.shape_cast %7 : vector<1x4x1xf32> to vector<4x1xf32>
    %9 = vector.broadcast %8 : vector<4x1xf32> to vector<4x256xf32>
    %10 = arith.addf %6, %9 : vector<4x256xf32>
    %cst = arith.constant 0.000000e+00 : f32
    %11 = vector.broadcast %cst : f32 to vector<4x256xf32>
    %12 = arith.maximumf %10, %11 : vector<4x256xf32>
    %c17_i32 = arith.constant 17 : i32
    %13 = tpu.dynamic_rotate %12 by %c17_i32 dim 1 : vector<4x256xf32>, i32 -> vector<4x256xf32>
    %c0_7 = arith.constant 0 : index
    %c0_8 = arith.constant 0 : index
    %c0_9 = arith.constant 0 : index
    %14 = vector.load %arg4[%c0_7, %c0_8, %c0_9] : memref<9x1x256xf32, #tpu.memory_space<vmem>>, vector<1x1x256xf32>
    %15 = vector.shape_cast %14 : vector<1x1x256xf32> to vector<1x256xf32>
    %16 = vector.broadcast %15 : vector<1x256xf32> to vector<4x256xf32>
    %17 = arith.mulf %13, %16 : vector<4x256xf32>
    %18 = arith.truncf %17 : vector<4x256xf32> to vector<4x256xbf16>
    %c0_10 = arith.constant 0 : index
    %c0_11 = arith.constant 0 : index
    %19 = vector.load %arg6[%c0_10, %c0_11] : memref<36x256xbf16, #tpu.memory_space<vmem>>, vector<4x256xbf16>
    tpu.vector_store %arg6[%c0_10, %c0_11], %18 {strides = array<i32>} : memref<36x256xbf16, #tpu.memory_space<vmem>>, vector<4x256xbf16>,
    %c16_i32 = arith.constant 16 : i32
    %20 = tpu.dynamic_rotate %12 by %c16_i32 dim 1 : vector<4x256xf32>, i32 -> vector<4x256xf32>
    %c1_12 = arith.constant 1 : index
    %c0_13 = arith.constant 0 : index
    %c0_14 = arith.constant 0 : index
    %21 = vector.load %arg4[%c1_12, %c0_13, %c0_14] : memref<9x1x256xf32, #tpu.memory_space<vmem>>, vector<1x1x256xf32>
    %22 = vector.shape_cast %21 : vector<1x1x256xf32> to vector<1x256xf32>
    %23 = vector.broadcast %22 : vector<1x256xf32> to vector<4x256xf32>
    %24 = arith.mulf %20, %23 : vector<4x256xf32>
    %25 = arith.truncf %24 : vector<4x256xf32> to vector<4x256xbf16>
    %c4 = arith.constant 4 : index
    %c0_15 = arith.constant 0 : index
    %26 = vector.load %arg6[%c4, %c0_15] : memref<36x256xbf16, #tpu.memory_space<vmem>>, vector<4x256xbf16>
    tpu.vector_store %arg6[%c4, %c0_15], %25 {strides = array<i32>} : memref<36x256xbf16, #tpu.memory_space<vmem>>, vector<4x256xbf16>,
    %c15_i32 = arith.constant 15 : i32
    %27 = tpu.dynamic_rotate %12 by %c15_i32 dim 1 : vector<4x256xf32>, i32 -> vector<4x256xf32>
    %c2 = arith.constant 2 : index
    %c0_16 = arith.constant 0 : index
    %c0_17 = arith.constant 0 : index
    %28 = vector.load %arg4[%c2, %c0_16, %c0_17] : memref<9x1x256xf32, #tpu.memory_space<vmem>>, vector<1x1x256xf32>
    %29 = vector.shape_cast %28 : vector<1x1x256xf32> to vector<1x256xf32>
    %30 = vector.broadcast %29 : vector<1x256xf32> to vector<4x256xf32>
    %31 = arith.mulf %27, %30 : vector<4x256xf32>
    %32 = arith.truncf %31 : vector<4x256xf32> to vector<4x256xbf16>
    %c8 = arith.constant 8 : index
    %c0_18 = arith.constant 0 : index
    %33 = vector.load %arg6[%c8, %c0_18] : memref<36x256xbf16, #tpu.memory_space<vmem>>, vector<4x256xbf16>
    tpu.vector_store %arg6[%c8, %c0_18], %32 {strides = array<i32>} : memref<36x256xbf16, #tpu.memory_space<vmem>>, vector<4x256xbf16>,
    %c1_i32 = arith.constant 1 : i32
    %34 = tpu.dynamic_rotate %12 by %c1_i32 dim 1 : vector<4x256xf32>, i32 -> vector<4x256xf32>
    %c3 = arith.constant 3 : index
    %c0_19 = arith.constant 0 : index
    %c0_20 = arith.constant 0 : index
    %35 = vector.load %arg4[%c3, %c0_19, %c0_20] : memref<9x1x256xf32, #tpu.memory_space<vmem>>, vector<1x1x256xf32>
    %36 = vector.shape_cast %35 : vector<1x1x256xf32> to vector<1x256xf32>
    %37 = vector.broadcast %36 : vector<1x256xf32> to vector<4x256xf32>
    %38 = arith.mulf %34, %37 : vector<4x256xf32>
    %39 = arith.truncf %38 : vector<4x256xf32> to vector<4x256xbf16>
    %c12 = arith.constant 12 : index
    %c0_21 = arith.constant 0 : index
    %40 = vector.load %arg6[%c12, %c0_21] : memref<36x256xbf16, #tpu.memory_space<vmem>>, vector<4x256xbf16>
    tpu.vector_store %arg6[%c12, %c0_21], %39 {strides = array<i32>} : memref<36x256xbf16, #tpu.memory_space<vmem>>, vector<4x256xbf16>,
    %c4_22 = arith.constant 4 : index
    %c0_23 = arith.constant 0 : index
    %c0_24 = arith.constant 0 : index
    %41 = vector.load %arg4[%c4_22, %c0_23, %c0_24] : memref<9x1x256xf32, #tpu.memory_space<vmem>>, vector<1x1x256xf32>
    %42 = vector.shape_cast %41 : vector<1x1x256xf32> to vector<1x256xf32>
    %43 = vector.broadcast %42 : vector<1x256xf32> to vector<4x256xf32>
    %44 = arith.mulf %12, %43 : vector<4x256xf32>
    %45 = arith.truncf %44 : vector<4x256xf32> to vector<4x256xbf16>
    %c16 = arith.constant 16 : index
    %c0_25 = arith.constant 0 : index
    %46 = vector.load %arg6[%c16, %c0_25] : memref<36x256xbf16, #tpu.memory_space<vmem>>, vector<4x256xbf16>
    tpu.vector_store %arg6[%c16, %c0_25], %45 {strides = array<i32>} : memref<36x256xbf16, #tpu.memory_space<vmem>>, vector<4x256xbf16>,
    %c255_i32 = arith.constant 255 : i32
    %47 = tpu.dynamic_rotate %12 by %c255_i32 dim 1 : vector<4x256xf32>, i32 -> vector<4x256xf32>
    %c5 = arith.constant 5 : index
    %c0_26 = arith.constant 0 : index
    %c0_27 = arith.constant 0 : index
    %48 = vector.load %arg4[%c5, %c0_26, %c0_27] : memref<9x1x256xf32, #tpu.memory_space<vmem>>, vector<1x1x256xf32>
    %49 = vector.shape_cast %48 : vector<1x1x256xf32> to vector<1x256xf32>
    %50 = vector.broadcast %49 : vector<1x256xf32> to vector<4x256xf32>
    %51 = arith.mulf %47, %50 : vector<4x256xf32>
    %52 = arith.truncf %51 : vector<4x256xf32> to vector<4x256xbf16>
    %c20 = arith.constant 20 : index
    %c0_28 = arith.constant 0 : index
    %53 = vector.load %arg6[%c20, %c0_28] : memref<36x256xbf16, #tpu.memory_space<vmem>>, vector<4x256xbf16>
    tpu.vector_store %arg6[%c20, %c0_28], %52 {strides = array<i32>} : memref<36x256xbf16, #tpu.memory_space<vmem>>, vector<4x256xbf16>,
    %c241_i32 = arith.constant 241 : i32
    %54 = tpu.dynamic_rotate %12 by %c241_i32 dim 1 : vector<4x256xf32>, i32 -> vector<4x256xf32>
    %c6 = arith.constant 6 : index
    %c0_29 = arith.constant 0 : index
    %c0_30 = arith.constant 0 : index
    %55 = vector.load %arg4[%c6, %c0_29, %c0_30] : memref<9x1x256xf32, #tpu.memory_space<vmem>>, vector<1x1x256xf32>
    %56 = vector.shape_cast %55 : vector<1x1x256xf32> to vector<1x256xf32>
    %57 = vector.broadcast %56 : vector<1x256xf32> to vector<4x256xf32>
    %58 = arith.mulf %54, %57 : vector<4x256xf32>
    %59 = arith.truncf %58 : vector<4x256xf32> to vector<4x256xbf16>
    %c24 = arith.constant 24 : index
    %c0_31 = arith.constant 0 : index
    %60 = vector.load %arg6[%c24, %c0_31] : memref<36x256xbf16, #tpu.memory_space<vmem>>, vector<4x256xbf16>
    tpu.vector_store %arg6[%c24, %c0_31], %59 {strides = array<i32>} : memref<36x256xbf16, #tpu.memory_space<vmem>>, vector<4x256xbf16>,
    %c240_i32 = arith.constant 240 : i32
    %61 = tpu.dynamic_rotate %12 by %c240_i32 dim 1 : vector<4x256xf32>, i32 -> vector<4x256xf32>
    %c7 = arith.constant 7 : index
    %c0_32 = arith.constant 0 : index
    %c0_33 = arith.constant 0 : index
    %62 = vector.load %arg4[%c7, %c0_32, %c0_33] : memref<9x1x256xf32, #tpu.memory_space<vmem>>, vector<1x1x256xf32>
    %63 = vector.shape_cast %62 : vector<1x1x256xf32> to vector<1x256xf32>
    %64 = vector.broadcast %63 : vector<1x256xf32> to vector<4x256xf32>
    %65 = arith.mulf %61, %64 : vector<4x256xf32>
    %66 = arith.truncf %65 : vector<4x256xf32> to vector<4x256xbf16>
    %c28 = arith.constant 28 : index
    %c0_34 = arith.constant 0 : index
    %67 = vector.load %arg6[%c28, %c0_34] : memref<36x256xbf16, #tpu.memory_space<vmem>>, vector<4x256xbf16>
    tpu.vector_store %arg6[%c28, %c0_34], %66 {strides = array<i32>} : memref<36x256xbf16, #tpu.memory_space<vmem>>, vector<4x256xbf16>,
    %c239_i32 = arith.constant 239 : i32
    %68 = tpu.dynamic_rotate %12 by %c239_i32 dim 1 : vector<4x256xf32>, i32 -> vector<4x256xf32>
    %c8_35 = arith.constant 8 : index
    %c0_36 = arith.constant 0 : index
    %c0_37 = arith.constant 0 : index
    %69 = vector.load %arg4[%c8_35, %c0_36, %c0_37] : memref<9x1x256xf32, #tpu.memory_space<vmem>>, vector<1x1x256xf32>
    %70 = vector.shape_cast %69 : vector<1x1x256xf32> to vector<1x256xf32>
    %71 = vector.broadcast %70 : vector<1x256xf32> to vector<4x256xf32>
    %72 = arith.mulf %68, %71 : vector<4x256xf32>
    %73 = arith.truncf %72 : vector<4x256xf32> to vector<4x256xbf16>
    %c32 = arith.constant 32 : index
    %c0_38 = arith.constant 0 : index
    %74 = vector.load %arg6[%c32, %c0_38] : memref<36x256xbf16, #tpu.memory_space<vmem>>, vector<4x256xbf16>
    tpu.vector_store %arg6[%c32, %c0_38], %73 {strides = array<i32>} : memref<36x256xbf16, #tpu.memory_space<vmem>>, vector<4x256xbf16>,
    %c0_39 = arith.constant 0 : index
    %c0_40 = arith.constant 0 : index
    %75 = vector.load %arg2[%c0_39, %c0_40] : memref<8x36xbf16, #tpu.memory_space<vmem>>, vector<8x36xbf16>
    %c0_41 = arith.constant 0 : index
    %c0_42 = arith.constant 0 : index
    %76 = vector.load %arg6[%c0_41, %c0_42] : memref<36x256xbf16, #tpu.memory_space<vmem>>, vector<36x256xbf16>
    %cst_43 = arith.constant dense<0.000000e+00> : vector<8x256xf32>
    %77 = tpu.matmul %75, %76, %cst_43 {dimension_numbers = #tpu.dot_dimension_numbers<[1], [0], [0], [1], [0, 0, 1, 1], [], []>} : vector<8x36xbf16>, vector<36x256xbf16>, vector<8x256xf32> -> vector<8x256xf32>
    %c0_44 = arith.constant 0 : index
    %c0_45 = arith.constant 0 : index
    %c0_46 = arith.constant 0 : index
    %78 = vector.load %arg5[%c0_44, %c0_45, %c0_46] : memref<1x8x256xf32, #tpu.memory_space<vmem>>, vector<1x8x256xf32>
    %79 = vector.shape_cast %78 : vector<1x8x256xf32> to vector<8x256xf32>
    %80 = vector.shape_cast %77 : vector<8x256xf32> to vector<1x8x256xf32>
    tpu.vector_store %arg5[%c0_44, %c0_45, %c0_46], %80 {strides = array<i32>} : memref<1x8x256xf32, #tpu.memory_space<vmem>>, vector<1x8x256xf32>,
    return
  }
  func.func @transform_0(%arg0: i32) -> (i32, i32, i32) {
    %c0_i32 = arith.constant 0 : i32
    %c0_i32_0 = arith.constant 0 : i32
    %c0_i32_1 = arith.constant 0 : i32
    return %arg0, %c0_i32, %c0_i32_0 : i32, i32, i32
  }
  func.func @transform_1(%arg0: i32) -> (i32, i32) {
    %c0_i32 = arith.constant 0 : i32
    %c0_i32_0 = arith.constant 0 : i32
    %c0_i32_1 = arith.constant 0 : i32
    return %c0_i32, %c0_i32_0 : i32, i32
  }
  func.func @transform_2(%arg0: i32) -> (i32, i32, i32) {
    %c0_i32 = arith.constant 0 : i32
    %c0_i32_0 = arith.constant 0 : i32
    %c0_i32_1 = arith.constant 0 : i32
    %c0_i32_2 = arith.constant 0 : i32
    return %c0_i32, %c0_i32_0, %c0_i32_1 : i32, i32, i32
  }
  func.func @transform_3(%arg0: i32) -> (i32, i32, i32) {
    %c0_i32 = arith.constant 0 : i32
    %c0_i32_0 = arith.constant 0 : i32
    %c0_i32_1 = arith.constant 0 : i32
    %c0_i32_2 = arith.constant 0 : i32
    return %c0_i32, %c0_i32_0, %c0_i32_1 : i32, i32, i32
  }
  func.func @transform_4(%arg0: i32) -> (i32, i32, i32) {
    %c0_i32 = arith.constant 0 : i32
    %c0_i32_0 = arith.constant 0 : i32
    %c0_i32_1 = arith.constant 0 : i32
    return %arg0, %c0_i32, %c0_i32_0 : i32, i32, i32
  }
}

</mosaic_0001>

<llo_original>
// kernel: basic_layer_forward.1
$region0: #{basic_layer_forward.1}
  #allocation0 [shape = 'u32[]', space=smem, size = 0x4, offset = 0x4, fixed_abs, tag = 'smem constant byte address 0x4 - core index']
  #allocation1 [shape = 'u32[144,128]{1,0:T(1,128)}', space=vmem, size = 0x12000, scoped, tag = 'internal scratch']
  #allocation2 [shape = 'bf16[36,256]{1,0:T(8,128)(2,1)}', space=vmem, size = 0x5000, scoped, tag = 'scratch operand']
  %s0 = inlined_call_operand.vmem [shape: bf16[2,4,256], index: 0, kind: input, shape index: {}]
  %s1 = inlined_call_operand.vmem [shape: bf16[8,36], index: 1, kind: input, shape index: {}]
  %s2 = inlined_call_operand.vmem [shape: f32[2,4,1], index: 2, kind: input, shape index: {}]
  %s3 = inlined_call_operand.vmem [shape: f32[9,1,256], index: 3, kind: input, shape index: {}]
  %s4 = inlined_call_operand.vmem [shape: f32[2,8,256], index: 4, kind: output, shape index: {}]
  %s5 = sld [smem:[#allocation0]]
  $region49: #{basic_layer_forward.1} parent=0
    _
  %s7 = ssub.s32 1, %s5
  %s8 = scalar_select 0, %s7, %s5
  loop: start=0, step=1, limit=4
  $region2: #{basic_layer_forward.1} parent=0 // loop_pre_header
    _
  $region3: #{basic_layer_forward.1} parent=0 // loop_header
    %s10 = sphi 0, %s14
    %p11 = scmp.ge.s32.totalorder %s10, 4
    %s20 = sphi 0, %s22
    %s23 = sphi 0, %s20
    %s24 = sphi 0, %s23
    %s40 = sphi 0, %s24
    %s44 = sphi 0, %s44
    %s46 = sphi 0, %s44
    %s47 = sphi 0, %s46
    %s61 = sphi 0, %s47
    %s65 = sphi 0, %s65
    %s67 = sphi 0, %s65
    %s68 = sphi 0, %s67
    %s82 = sphi 0, %s68
    %s86 = sphi 0, %s86
    %s88 = sphi 0, %s86
    %s89 = sphi 0, %s88
    %s103 = sphi 0, %s89
    %s109 = sphi 0, %s111
    %s112 = sphi 0, %s109
    %s113 = sphi 0, %s112
    %s129 = sphi 0, %s113
  $region4: #{basic_layer_forward.1} parent=0 // loop_header_branch
    %13 = sbr.rel (%p11) target = $region8
  $region5: #{basic_layer_forward.1} parent=0 // loop_body
    %s15 = ssub.s32 %s10, 1
    %s16 = ssub.s32 %s10, 2
    %s17 = sadd.s32 %s10, 1
    %s18 = ssub.s32 %s10, %s17
    %p19 = scmp.eq.s32.totalorder %s18, 0
    %s21 = sadd.s32 %s20, 1
    %s22 = scalar_select %p19, %s20, %s21
    %p25 = pneg %p19
    %p26 = scmp.eq.s32.totalorder %s10, 1
    %p27 = por %p25, %p26
    %p28 = scmp.ne.s32.totalorder %s20, %s23
    %p29 = scmp.eq.s32.totalorder %s10, 0
    %p30 = por %p28, %p29
    %p31 = scmp.ne.s32.totalorder %s20, %s23
    %p32 = scmp.eq.s32.totalorder %s15, 1
    %p33 = por %p31, %p32
    %p34 = scmp.ne.s32.totalorder %s23, %s24
    %p35 = scmp.eq.s32.totalorder %s15, 0
    %p36 = por %p34, %p35
    %p37 = scmp.ne.s32.totalorder %s23, %s24
    %p38 = scmp.eq.s32.totalorder %s16, 1
    %p39 = por %p37, %p38
    %p41 = scmp.ne.s32.totalorder %s24, %s40
    %p42 = scmp.eq.s32.totalorder %s16, 0
    %p43 = por %p41, %p42
    %s45 = sadd.s32 %s44, 1
    %p48 = scmp.eq.s32.totalorder %s10, 1
    %p49 = scmp.ne.s32.totalorder %s44, %s46
    %p50 = scmp.eq.s32.totalorder %s10, 0
    %p51 = por %p49, %p50
    %p52 = scmp.ne.s32.totalorder %s44, %s46
    %p53 = scmp.eq.s32.totalorder %s15, 1
    %p54 = por %p52, %p53
    %p55 = scmp.ne.s32.totalorder %s46, %s47
    %p56 = scmp.eq.s32.totalorder %s15, 0
    %p57 = por %p55, %p56
    %p58 = scmp.ne.s32.totalorder %s46, %s47
    %p59 = scmp.eq.s32.totalorder %s16, 1
    %p60 = por %p58, %p59
    %p62 = scmp.ne.s32.totalorder %s47, %s61
    %p63 = scmp.eq.s32.totalorder %s16, 0
    %p64 = por %p62, %p63
    %s66 = sadd.s32 %s65, 1
    %p69 = scmp.eq.s32.totalorder %s10, 1
    %p70 = scmp.ne.s32.totalorder %s65, %s67
    %p71 = scmp.eq.s32.totalorder %s10, 0
    %p72 = por %p70, %p71
    %p73 = scmp.ne.s32.totalorder %s65, %s67
    %p74 = scmp.eq.s32.totalorder %s15, 1
    %p75 = por %p73, %p74
    %p76 = scmp.ne.s32.totalorder %s67, %s68
    %p77 = scmp.eq.s32.totalorder %s15, 0
    %p78 = por %p76, %p77
    %p79 = scmp.ne.s32.totalorder %s67, %s68
    %p80 = scmp.eq.s32.totalorder %s16, 1
    %p81 = por %p79, %p80
    %p83 = scmp.ne.s32.totalorder %s68, %s82
    %p84 = scmp.eq.s32.totalorder %s16, 0
    %p85 = por %p83, %p84
    %s87 = sadd.s32 %s86, 1
    %p90 = scmp.eq.s32.totalorder %s10, 1
    %p91 = scmp.ne.s32.totalorder %s86, %s88
    %p92 = scmp.eq.s32.totalorder %s10, 0
    %p93 = por %p91, %p92
    %p94 = scmp.ne.s32.totalorder %s86, %s88
    %p95 = scmp.eq.s32.totalorder %s15, 1
    %p96 = por %p94, %p95
    %p97 = scmp.ne.s32.totalorder %s88, %s89
    %p98 = scmp.eq.s32.totalorder %s15, 0
    %p99 = por %p97, %p98
    %p100 = scmp.ne.s32.totalorder %s88, %s89
    %p101 = scmp.eq.s32.totalorder %s16, 1
    %p102 = por %p100, %p101
    %p104 = scmp.ne.s32.totalorder %s89, %s103
    %p105 = scmp.eq.s32.totalorder %s16, 0
    %p106 = por %p104, %p105
    %s107 = ssub.s32 %s10, %s17
    %p108 = scmp.eq.s32.totalorder %s107, 0
    %s110 = sadd.s32 %s109, 1
    %s111 = scalar_select %p108, %s109, %s110
    %p114 = pneg %p108
    %p115 = scmp.eq.s32.totalorder %s10, 1
    %p116 = por %p114, %p115
    %p117 = scmp.ne.s32.totalorder %s109, %s112
    %p118 = scmp.eq.s32.totalorder %s10, 0
    %p119 = por %p117, %p118
    %p120 = scmp.ne.s32.totalorder %s109, %s112
    %p121 = scmp.eq.s32.totalorder %s15, 1
    %p122 = por %p120, %p121
    %p123 = scmp.ne.s32.totalorder %s112, %s113
    %p124 = scmp.eq.s32.totalorder %s15, 0
    %p125 = por %p123, %p124
    %p126 = scmp.ne.s32.totalorder %s112, %s113
    %p127 = scmp.eq.s32.totalorder %s16, 1
    %p128 = por %p126, %p127
    %p130 = scmp.ne.s32.totalorder %s113, %s129
    %p131 = scmp.eq.s32.totalorder %s16, 0
    %p132 = por %p130, %p131
    %p133 = scmp.le.s32.totalorder 1, %s10
    %p134 = scmp.lt.s32.totalorder %s10, 3
    %p135 = pnand %p133, %p134
    %p136 = pneg %p135
    // Predicated region
    $region9: #{basic_layer_forward.1} parent=5 // pred_check
      _
    $region10: #{basic_layer_forward.1} parent=5 // pred_check_branch
      %138 = sbr.rel (%p135) target = $region12
    $region11: #{basic_layer_forward.1} parent=5 // pred_region
      %s139 = ssub.s32 %s10, 1
      // Predicated region
      $region13: #{basic_layer_forward.1} parent=11 // pred_check
        %p140 = pneg %p57
      $region14: #{basic_layer_forward.1} parent=11 // pred_check_branch
        %142 = sbr.rel (%p140) target = $region16
      $region15: #{basic_layer_forward.1} parent=11 // pred_region
        _
      $region16: #{basic_layer_forward.1} parent=11 // pred_fallthru
        _
      // Predicated region
      $region17: #{basic_layer_forward.1} parent=11 // pred_check
        %p143 = pneg %p78
      $region18: #{basic_layer_forward.1} parent=11 // pred_check_branch
        %145 = sbr.rel (%p143) target = $region20
      $region19: #{basic_layer_forward.1} parent=11 // pred_region
        _
      $region20: #{basic_layer_forward.1} parent=11 // pred_fallthru
        _
      // Predicated region
      $region21: #{basic_layer_forward.1} parent=11 // pred_check
        %p146 = pneg %p99
      $region22: #{basic_layer_forward.1} parent=11 // pred_check_branch
        %148 = sbr.rel (%p146) target = $region24
      $region23: #{basic_layer_forward.1} parent=11 // pred_region
        _
      $region24: #{basic_layer_forward.1} parent=11 // pred_fallthru
        _
    $region12: #{basic_layer_forward.1} parent=5 // pred_fallthru
      _
    %p149 = scmp.lt.s32.totalorder %s10, 2
    // Predicated region
    $region25: #{basic_layer_forward.1} parent=5 // pred_check
      %p150 = pneg %p149
    $region26: #{basic_layer_forward.1} parent=5 // pred_check_branch
      %152 = sbr.rel (%p150) target = $region28
    $region27: #{basic_layer_forward.1} parent=5 // pred_region
      // Predicated region
      $region29: #{basic_layer_forward.1} parent=27 // pred_check
        %p153 = pneg %p30
      $region30: #{basic_layer_forward.1} parent=27 // pred_check_branch
        %155 = sbr.rel (%p153) target = $region32
      $region31: #{basic_layer_forward.1} parent=27 // pred_region
        %p156 = scmp.lt.s32.totalorder %s10, 1
        %s157 = scalar_select %p156, %s10, 1
        %s158 = smul.addr %s157, 2
        %s159 = smul.addr %s158, 2
        %s160 = scalar_lea.vmem %s0, %s159
      $region32: #{basic_layer_forward.1} parent=27 // pred_fallthru
        _
    $region28: #{basic_layer_forward.1} parent=5 // pred_fallthru
      _
    %p161 = scmp.le.s32.totalorder 1, %s10
    %p162 = scmp.lt.s32.totalorder %s10, 3
    %p163 = pnand %p161, %p162
    %p164 = pneg %p163
    // Predicated region
    $region33: #{basic_layer_forward.1} parent=5 // pred_check
      _
    $region34: #{basic_layer_forward.1} parent=5 // pred_check_branch
      %166 = sbr.rel (%p163) target = $region36
    $region35: #{basic_layer_forward.1} parent=5 // pred_region
      %s167 = ssub.s32 %s10, 1
      %p168 = scmp.lt.s32.totalorder %s15, 1
      %s169 = scalar_select %p168, %s15, 1
      %s170 = smul.addr %s169, 2
      %s171 = smul.addr %s170, 2
      %s172 = scalar_lea.vmem %s0, %s171
      %p173 = pneg %p36
      %p174 = pneg %p33
      %p175 = pneg %p57
      %p176 = pneg %p54
      %p177 = pneg %p78
      %p178 = pneg %p75
      %p179 = pneg %p99
      %p180 = pneg %p96
      %p181 = pneg %p125
      %p182 = pneg %p122
      %p183 = scmp.lt.s32.totalorder %s15, 1
      %s184 = scalar_select %p183, %s15, 1
      %s185 = smul.addr %s184, 2
      %s186 = smul.addr %s185, 8
      %s187 = scalar_lea.vmem %s4, %s186
      %p188 = scmp.lt.s32.totalorder %s15, 1
      %s189 = scalar_select %p188, %s15, 1
      %s190 = smul.addr %s189, 2
      %s191 = smul.addr %s190, 2
      %s192 = scalar_lea.vmem %s0, %s191
      %p193 = scmp.lt.s32.totalorder %s15, 1
      %s194 = scalar_select %p193, %s15, 1
      %s195 = smul.addr %s194, 2
      %s196 = smul.addr %s195, 8
      %s197 = scalar_lea.vmem %s4, %s196
      %v199 = vld [vmem:[%s192] sm:$0xf]
      %v200 = vunpack.c.l.bf16 %v199
      %v201 = vld [vmem:[%s2] sm:$0xf]
      %203 = vset.pattern.permute.xlu0 0
      %204 = vperm.xlu0 %203, %v201
      %v205 = vpop.permute.xlu0 %204
      %v207 = vunpack.c.l.s4 839922192
      %v208 = vunpack.c.0.s8 %v207
      %v209 = vlaneseq
      %v210 = vshrl.u32 %v209, 7
      %v211 = vsub.s32 %v208, %v210
      %v212 = vrot.slane %v205, %v211
      %v214 = vmul.f32 %v200, %v212
      %s215 = scalar_lea.vmem %s2, 4
      %v216 = vld [vmem:[%s215] sm:$0xf]
      %218 = vset.pattern.permute.xlu0 0
      %219 = vperm.xlu0 %218, %v216
      %v220 = vpop.permute.xlu0 %219
      %v222 = vunpack.c.l.s4 839922192
      %v223 = vunpack.c.0.s8 %v222
      %v224 = vlaneseq
      %v225 = vshrl.u32 %v224, 7
      %v226 = vsub.s32 %v223, %v225
      %v227 = vrot.slane %v220, %v226
      %v229 = vadd.f32 %v214, %v227
      %v230 = vmax.f32 %v229, 0.0
      %v232 = vcombine.high %v230, %v230
      %234 = vrot.lane.b32.xlu0 %v230, 17
      %v235 = vpop.permute.xlu0 %234
      %236 = vrot.lane.b32.xlu0 %v232, 17
      %v237 = vpop.permute.xlu0 %236
      %v238 = vlaneseq
      %v239 = vand.u32 %v238, 127
      %vm240 = vcmp.lt.s32.totalorder %v239, 17
      %v241 = vsel %vm240, %v235, %v237
      %v242 = vsel %vm240, %v237, %v235
      %v243 = vld [vmem:[%s3] sm:$0x3]
      %v245 = vlaneseq
      %v246 = vshrl.u32 %v245, 7
      %v247 = vsub.s32 0, %v246
      %v248 = vrot.slane %v243, %v247
      %v249 = vlaneseq
      %v250 = vshrl.u32 %v249, 7
      %v251 = vsub.s32 1, %v250
      %v252 = vrot.slane %v243, %v251
      %v255 = vmul.f32 %v242, %v248
      %v256 = vmul.f32 %v241, %v252
      %v257 = vpack.c.bf16 %v255, %v255
      %v258 = vpack.c.bf16 %v256, %v256
      %v261 = vunpack.c.l.b16 %v257
      %v262 = vunpack.c.l.b16 %v258
      %v263 = vpack.c.b16 %v262, %v261
      %265 = vst [vmem:[#allocation2] sm:$0x33] %v263
      %266 = vrot.lane.b32.xlu0 %v230, 16
      %v267 = vpop.permute.xlu0 %266
      %268 = vrot.lane.b32.xlu0 %v232, 16
      %v269 = vpop.permute.xlu0 %268
      %vm270 = vcmp.lt.s32.totalorder %v239, 16
      %v271 = vsel %vm270, %v267, %v269
      %v272 = vsel %vm270, %v269, %v267
      %s273 = scalar_lea.vmem %s3, 2
      %v274 = vld [vmem:[%s273] sm:$0x3]
      %v276 = vlaneseq
      %v277 = vshrl.u32 %v276, 7
      %v278 = vsub.s32 0, %v277
      %v279 = vrot.slane %v274, %v278
      %v280 = vlaneseq
      %v281 = vshrl.u32 %v280, 7
      %v282 = vsub.s32 1, %v281
      %v283 = vrot.slane %v274, %v282
      %v286 = vmul.f32 %v272, %v279
      %v287 = vmul.f32 %v271, %v283
      %v288 = vpack.c.bf16 %v286, %v286
      %v289 = vpack.c.bf16 %v287, %v287
      %v292 = vunpack.c.l.b16 %v288
      %v293 = vunpack.c.l.b16 %v289
      %v294 = vpack.c.b16 %v293, %v292
      %v295 = vrot.slane %v294, 6
      %297 = vst [vmem:[#allocation2] sm:$0xcc] %v295
      %298 = vrot.lane.b32.xlu0 %v230, 15
      %v299 = vpop.permute.xlu0 %298
      %300 = vrot.lane.b32.xlu0 %v232, 15
      %v301 = vpop.permute.xlu0 %300
      %vm302 = vcmp.lt.s32.totalorder %v239, 15
      %v303 = vsel %vm302, %v299, %v301
      %v304 = vsel %vm302, %v301, %v299
      %s305 = scalar_lea.vmem %s3, 4
      %v306 = vld [vmem:[%s305] sm:$0x3]
      %v308 = vlaneseq
      %v309 = vshrl.u32 %v308, 7
      %v310 = vsub.s32 0, %v309
      %v311 = vrot.slane %v306, %v310
      %v312 = vlaneseq
      %v313 = vshrl.u32 %v312, 7
      %v314 = vsub.s32 1, %v313
      %v315 = vrot.slane %v306, %v314
      %v318 = vmul.f32 %v304, %v311
      %v319 = vmul.f32 %v303, %v315
      %v320 = vpack.c.bf16 %v318, %v318
      %v321 = vpack.c.bf16 %v319, %v319
      %v324 = vunpack.c.l.b16 %v320
      %v325 = vunpack.c.l.b16 %v321
      %v326 = vpack.c.b16 %v325, %v324
      %328 = vst [vmem:[#allocation2 + $0x8] sm:$0x33] %v326
      %329 = vrot.lane.b32.xlu0 %v230, 1
      %v330 = vpop.permute.xlu0 %329
      %331 = vrot.lane.b32.xlu0 %v232, 1
      %v332 = vpop.permute.xlu0 %331
      %vm333 = vcmp.lt.s32.totalorder %v239, 1
      %v334 = vsel %vm333, %v330, %v332
      %v335 = vsel %vm333, %v332, %v330
      %s336 = scalar_lea.vmem %s3, 6
      %v337 = vld [vmem:[%s336] sm:$0x3]
      %v339 = vlaneseq
      %v340 = vshrl.u32 %v339, 7
      %v341 = vsub.s32 0, %v340
      %v342 = vrot.slane %v337, %v341
      %v343 = vlaneseq
      %v344 = vshrl.u32 %v343, 7
      %v345 = vsub.s32 1, %v344
      %v346 = vrot.slane %v337, %v345
      %v349 = vmul.f32 %v335, %v342
      %v350 = vmul.f32 %v334, %v346
      %v351 = vpack.c.bf16 %v349, %v349
      %v352 = vpack.c.bf16 %v350, %v350
      %v355 = vunpack.c.l.b16 %v351
      %v356 = vunpack.c.l.b16 %v352
      %v357 = vpack.c.b16 %v356, %v355
      %v358 = vrot.slane %v357, 6
      %360 = vst [vmem:[#allocation2 + $0x8] sm:$0xcc] %v358
      %s361 = scalar_lea.vmem %s3, 8
      %v362 = vld [vmem:[%s361] sm:$0x3]
      %v364 = vlaneseq
      %v365 = vshrl.u32 %v364, 7
      %v366 = vsub.s32 0, %v365
      %v367 = vrot.slane %v362, %v366
      %v368 = vlaneseq
      %v369 = vshrl.u32 %v368, 7
      %v370 = vsub.s32 1, %v369
      %v371 = vrot.slane %v362, %v370
      %v372 = vcombine.low %v367, %v371
      %v374 = vmul.f32 %v230, %v372
      %v376 = vcombine.high %v374, %v374
      %v378 = vpack.c.bf16 %v374, %v374
      %v379 = vpack.c.bf16 %v376, %v376
      %v382 = vunpack.c.l.b16 %v378
      %v383 = vunpack.c.l.b16 %v379
      %v384 = vpack.c.b16 %v383, %v382
      %386 = vst [vmem:[#allocation2 + $0x10] sm:$0x33] %v384
      %387 = vrot.lane.b32.xlu0 %v230, 127
      %v388 = vpop.permute.xlu0 %387
      %389 = vrot.lane.b32.xlu0 %v232, 127
      %v390 = vpop.permute.xlu0 %389
      %vm391 = vcmp.lt.s32.totalorder %v239, 127
      %v392 = vsel %vm391, %v388, %v390
      %v393 = vsel %vm391, %v390, %v388
      %s394 = scalar_lea.vmem %s3, 10
      %v395 = vld [vmem:[%s394] sm:$0x3]
      %v397 = vlaneseq
      %v398 = vshrl.u32 %v397, 7
      %v399 = vsub.s32 0, %v398
      %v400 = vrot.slane %v395, %v399
      %v401 = vlaneseq
      %v402 = vshrl.u32 %v401, 7
      %v403 = vsub.s32 1, %v402
      %v404 = vrot.slane %v395, %v403
      %v407 = vmul.f32 %v392, %v400
      %v408 = vmul.f32 %v393, %v404
      %v409 = vpack.c.bf16 %v407, %v407
      %v410 = vpack.c.bf16 %v408, %v408
      %v413 = vunpack.c.l.b16 %v409
      %v414 = vunpack.c.l.b16 %v410
      %v415 = vpack.c.b16 %v414, %v413
      %v416 = vrot.slane %v415, 6
      %418 = vst [vmem:[#allocation2 + $0x10] sm:$0xcc] %v416
      %419 = vrot.lane.b32.xlu0 %v230, 113
      %v420 = vpop.permute.xlu0 %419
      %421 = vrot.lane.b32.xlu0 %v232, 113
      %v422 = vpop.permute.xlu0 %421
      %vm423 = vcmp.lt.s32.totalorder %v239, 113
      %v424 = vsel %vm423, %v420, %v422
      %v425 = vsel %vm423, %v422, %v420
      %s426 = scalar_lea.vmem %s3, 12
      %v427 = vld [vmem:[%s426] sm:$0x3]
      %v429 = vlaneseq
      %v430 = vshrl.u32 %v429, 7
      %v431 = vsub.s32 0, %v430
      %v432 = vrot.slane %v427, %v431
      %v433 = vlaneseq
      %v434 = vshrl.u32 %v433, 7
      %v435 = vsub.s32 1, %v434
      %v436 = vrot.slane %v427, %v435
      %v439 = vmul.f32 %v424, %v432
      %v440 = vmul.f32 %v425, %v436
      %v441 = vpack.c.bf16 %v439, %v439
      %v442 = vpack.c.bf16 %v440, %v440
      %v445 = vunpack.c.l.b16 %v441
      %v446 = vunpack.c.l.b16 %v442
      %v447 = vpack.c.b16 %v446, %v445
      %449 = vst [vmem:[#allocation2 + $0x18] sm:$0x33] %v447
      %450 = vrot.lane.b32.xlu0 %v230, 112
      %v451 = vpop.permute.xlu0 %450
      %452 = vrot.lane.b32.xlu0 %v232, 112
      %v453 = vpop.permute.xlu0 %452
      %vm454 = vcmp.lt.s32.totalorder %v239, 112
      %v455 = vsel %vm454, %v451, %v453
      %v456 = vsel %vm454, %v453, %v451
      %s457 = scalar_lea.vmem %s3, 14
      %v458 = vld [vmem:[%s457] sm:$0x3]
      %v460 = vlaneseq
      %v461 = vshrl.u32 %v460, 7
      %v462 = vsub.s32 0, %v461
      %v463 = vrot.slane %v458, %v462
      %v464 = vlaneseq
      %v465 = vshrl.u32 %v464, 7
      %v466 = vsub.s32 1, %v465
      %v467 = vrot.slane %v458, %v466
      %v470 = vmul.f32 %v455, %v463
      %v471 = vmul.f32 %v456, %v467
      %v472 = vpack.c.bf16 %v470, %v470
      %v473 = vpack.c.bf16 %v471, %v471
      %v476 = vunpack.c.l.b16 %v472
      %v477 = vunpack.c.l.b16 %v473
      %v478 = vpack.c.b16 %v477, %v476
      %v479 = vrot.slane %v478, 6
      %481 = vst [vmem:[#allocation2 + $0x18] sm:$0xcc] %v479
      %482 = vrot.lane.b32.xlu0 %v230, 111
      %v483 = vpop.permute.xlu0 %482
      %484 = vrot.lane.b32.xlu0 %v232, 111
      %v485 = vpop.permute.xlu0 %484
      %vm486 = vcmp.lt.s32.totalorder %v239, 111
      %v487 = vsel %vm486, %v483, %v485
      %v488 = vsel %vm486, %v485, %v483
      %s489 = scalar_lea.vmem %s3, 16
      %v490 = vld [vmem:[%s489] sm:$0x3]
      %v492 = vlaneseq
      %v493 = vshrl.u32 %v492, 7
      %v494 = vsub.s32 0, %v493
      %v495 = vrot.slane %v490, %v494
      %v496 = vlaneseq
      %v497 = vshrl.u32 %v496, 7
      %v498 = vsub.s32 1, %v497
      %v499 = vrot.slane %v490, %v498
      %v502 = vmul.f32 %v487, %v495
      %v503 = vmul.f32 %v488, %v499
      %v504 = vpack.c.bf16 %v502, %v502
      %v505 = vpack.c.bf16 %v503, %v503
      %v508 = vunpack.c.l.b16 %v504
      %v509 = vunpack.c.l.b16 %v505
      %v510 = vpack.c.b16 %v509, %v508
      %512 = vst [vmem:[#allocation2 + $0x20] sm:$0x33] %v510
      %v513 = vld [vmem:[%s1] sm:$0xf]
      %v514 = vld [vmem:[#allocation2] sm:$0xff]
      %v515 = vld [vmem:[#allocation2 + $0x8] sm:$0xff]
      %v516 = vld [vmem:[#allocation2 + $0x10] sm:$0xff]
      %v517 = vld [vmem:[#allocation2 + $0x18] sm:$0xff]
      %v518 = vld [vmem:[#allocation2 + $0x20] sm:$0x33]
      %v524 = vunpack.c.l.b16 %v514
      %v525 = vunpack.c.h.b16 %v514
      %v526 = vunpack.c.l.b16 %v515
      %v527 = vunpack.c.h.b16 %v515
      %v528 = vunpack.c.l.b16 %v516
      %v529 = vunpack.c.h.b16 %v516
      %v530 = vunpack.c.l.b16 %v517
      %v531 = vunpack.c.h.b16 %v517
      %v532 = vunpack.c.l.b16 %v518
      %v533 = vunpack.c.h.b16 %v518
      %v534 = vpack.c.b16 %v526, %v524
      %v535 = vpack.c.b16 %v527, %v525
      %v536 = vpack.c.b16 %v530, %v528
      %v537 = vpack.c.b16 %v531, %v529
      %v538 = vpack.c.b16 %v532, %v532
      %v539 = vpack.c.b16 %v533, %v533
      %vm544 = vcmask 293888
      %v546 = vsel %vm544, %v513, 0
      %vm548 = vcmask 1041408
      %v550 = vsel %vm548, %v538, 0
      %v553 = vsel %vm548, %v539, 0
      %555 = vmatprep.subr.bf16.mxu0 0
      %556 = vmatpush1.bf16.msra.mxu0 0
      %557 = vmatprep.subr.bf16.mxu0 0
      %558 = vmatpush1.bf16.msra.mxu0 0
      %559 = vmatprep.subr.bf16.mxu0 0
      %560 = vmatpush1.bf16.msra.mxu0 0
      %561 = vmatprep.subr.bf16.mxu0 0
      %562 = vmatpush1.bf16.msra.mxu0 0
      %563 = vmatprep.subr.bf16.mxu0 0
      %564 = vmatpush1.bf16.msra.mxu0 0
      %565 = vmatprep.subr.bf16.mxu0 %v553
      %566 = vmatpush1.bf16.msra.mxu0 %v550
      %567 = vmatprep.subr.bf16.mxu0 %v537
      %568 = vmatpush1.bf16.msra.mxu0 %v536
      %569 = vmatprep.subr.bf16.mxu0 %v535
      %570 = vmatpush1.bf16.msra.mxu0 %v534
      %571 = vmatprep.subr.bf16.mxu0 0
      %572 = vmatpush2.bf16.msra.mxu0 0
      %573 = vmatprep.subr.bf16.mxu0 0
      %574 = vmatpush2.bf16.msra.mxu0 0
      %575 = vmatprep.subr.bf16.mxu0 0
      %576 = vmatpush2.bf16.msra.mxu0 0
      %577 = vmatprep.subr.bf16.mxu0 0
      %578 = vmatpush2.bf16.msra.mxu0 0
      %579 = vmatprep.subr.bf16.mxu0 0
      %580 = vmatpush2.bf16.msra.mxu0 0
      %581 = vmatprep.subr.bf16.mxu0 0
      %582 = vmatpush2.bf16.msra.mxu0 0
      %583 = vmatprep.subr.bf16.mxu0 0
      %584 = vmatpush2.bf16.msra.mxu0 0
      %585 = vmatprep.subr.bf16.mxu0 0
      %586 = vmatpush2.bf16.msra.mxu0 0
      %587 = vmatprep.mubr.bf16.mxu0 0
      %588 = vmatmul.mubr.bf16.gmra.mxu0 %v546
      %v589 = vpop.f32.mrf.mxu0
      %v590 = vadd.f32 0.0, %v589
      %v591 = vpop.f32.mrf.mxu0
      %v592 = vadd.f32 0.0, %v591
      %v593 = vpop.f32.mrf.mxu0
      %v594 = vpop.f32.mrf.mxu0
      %595 = vdwg.mxu0
      %596 = vst [vmem:[%s197] sm:$0xff] %v590
      %597 = vst [vmem:[%s197 + $0x8] sm:$0xff] %v592
      %p598 = scmp.lt.s32.totalorder %s15, 1
      %s599 = scalar_select %p598, %s15, 1
      %s600 = smul.addr %s599, 2
      %s601 = smul.addr %s600, 8
      %s602 = scalar_lea.vmem %s4, %s601
      // Predicated region
      $region37: #{basic_layer_forward.1} parent=35 // pred_check
        %p603 = pneg %p122
      $region38: #{basic_layer_forward.1} parent=35 // pred_check_branch
        %605 = sbr.rel (%p603) target = $region40
      $region39: #{basic_layer_forward.1} parent=35 // pred_region
        _
      $region40: #{basic_layer_forward.1} parent=35 // pred_fallthru
        _
    $region36: #{basic_layer_forward.1} parent=5 // pred_fallthru
      _
    %p606 = scmp.le.s32.totalorder 2, %s10
    // Predicated region
    $region41: #{basic_layer_forward.1} parent=5 // pred_check
      %p607 = pneg %p606
    $region42: #{basic_layer_forward.1} parent=5 // pred_check_branch
      %609 = sbr.rel (%p607) target = $region44
    $region43: #{basic_layer_forward.1} parent=5 // pred_region
      %s610 = ssub.s32 %s10, 2
      // Predicated region
      $region45: #{basic_layer_forward.1} parent=43 // pred_check
        %p611 = pneg %p128
      $region46: #{basic_layer_forward.1} parent=43 // pred_check_branch
        %613 = sbr.rel (%p611) target = $region48
      $region47: #{basic_layer_forward.1} parent=43 // pred_region
        %p614 = scmp.lt.s32.totalorder %s16, 1
        %s615 = scalar_select %p614, %s16, 1
        %s616 = smul.addr %s615, 2
        %s617 = smul.addr %s616, 8
        %s618 = scalar_lea.vmem %s4, %s617
      $region48: #{basic_layer_forward.1} parent=43 // pred_fallthru
        _
    $region44: #{basic_layer_forward.1} parent=5 // pred_fallthru
      _
  $region6: #{basic_layer_forward.1} parent=0 // loop_footer
    %s14 = sadd.s32 1, %s10
  $region7: #{basic_layer_forward.1} parent=0 // loop_footer_branch
    %9 = sbr.rel target = $region3
  $region8: #{basic_layer_forward.1} parent=0 // loop_exit
    _

</llo_original>
